<compile_context>
chip_gen: v7x
topology: tpu7x:2x2x1
jax: 0.10.0
libtpu: 0.0.40
codegen_flags: <defaults>
</compile_context>

<pallas_src>
import math

import jax
import jax.numpy as jnp
from jax.experimental import pallas as pl
from jax.experimental.pallas import tpu as pltpu

LANES = 128
ACC_ROWS = 64          # accumulator sublane rows (8 vregs -> ILP for the 4 VALU slots)
PAD_LOGIT = -1.0e4     # padded logit; with target 0 it contributes exactly 0.0 loss
VMEM_LIMIT_BYTES = 32 * 1024 * 1024


def _cdiv(a, b):
    return -(-a // b)


def _round_up(a, b):
    return _cdiv(a, b) * b


def _tpu_generation_defaults():
    """(max_tile_rows, min_blocks) tuned per TPU generation."""
    kind = ""
    try:
        kind = jax.devices()[0].device_kind.lower()
    except Exception:
        pass
    if "v7" in kind:
        # 2 MiB blocks amortize per-step overhead at 3.2 TB/s; >=2 blocks so the
        # "parallel" chw-block axis can be sharded across the 2 TensorCores.
        return 4096, 2
    return 2048, 1


def _make_bce_kernel(tile, acc_rows, weighted):
    """BCE-with-logits partial-sum kernel.

    Grid is (num_chw_blocks [parallel], N [arbitrary]).  Refs:
      weighted: (x_ref, y_ref, w_ref, o_ref, acc_ref)
      else:     (x_ref, y_ref,        o_ref, acc_ref)
    Each chw block j emits its own (1, 1, 128) partial-sum row; acc_ref is
    per-core scratch, zeroed at the start of every j-sweep, so the parallel
    split across TensorCores is correct.
    """
    groups = tile // acc_rows

    def kernel(*refs):
        if weighted:
            x_ref, y_ref, w_ref, o_ref, acc_ref = refs
        else:
            x_ref, y_ref, o_ref, acc_ref = refs

        b = pl.program_id(1)  # batch index (innermost)

        @pl.when(b == 0)
        def _():
            acc_ref[...] = jnp.zeros_like(acc_ref)

        x = x_ref[0].astype(jnp.float32)  # (tile, LANES)
        y = y_ref[0].astype(jnp.float32)

        # Numerically stable BCE-with-logits (same as PyTorch):
        #   loss = max(x, 0) - x*y + log(1 + exp(-|x|))
        # Padded elements (x = -1e4, y = 0) evaluate to exactly 0.0.
        per = jnp.maximum(x, 0.0) - x * y + jnp.log1p(jnp.exp(-jnp.abs(x)))

        if weighted:
            # Un-broadcast (chw_rows_pad, 128) weight, resident across the
            # batch sweep (index_map depends only on j).
            per = per * w_ref[...].astype(jnp.float32)

        # VPU-only partial reduction into a wide accumulator:
        # (tile, 128) -> (groups, acc_rows, 128) -> sum over leading axis.
        acc_ref[...] += per.reshape(groups, acc_rows, LANES).sum(axis=0)

        @pl.when(b == pl.num_programs(1) - 1)
        def _():
            # Sublane reduce only; the tiny cross-block/cross-lane reduce and
            # the 1/numel normalization happen once in the wrapper epilogue.
            o_ref[0] = jnp.sum(acc_ref[...], axis=0, keepdims=True)

    return kernel


def bce_with_logits_loss(output, target, weight_chw=None, *,
                         max_tile_rows=None, min_blocks=None):
    """Equivalent of BCE_Loss(weight).forward(output, target).

    output, target: (N, ...) logits / targets (any trailing shape, any float
                    dtype; cast to f32 inside the kernel).
    weight_chw: optional weight with shape == output.shape[1:] (the torch
                module builds a per-channel (C, 256, 256) weight); broadcast
                over the batch dimension, as in BCEWithLogitsLoss.
    Returns a scalar f32 loss (reduction='mean').
    """
    assert output.shape == target.shape
    n_batch = output.shape[0]
    chw = math.prod(output.shape[1:])
    total = n_batch * chw

    d_tile, d_blocks = _tpu_generation_defaults()
    if max_tile_rows is None:
        max_tile_rows = d_tile
    if min_blocks is None:
        min_blocks = d_blocks

    chw_rows = _cdiv(chw, LANES)
    num_blocks = _cdiv(chw_rows, max_tile_rows)
    if chw_rows >= 2 * ACC_ROWS:
        num_blocks = max(num_blocks, min_blocks)

    tile_raw = _cdiv(chw_rows, num_blocks)
    if tile_raw >= ACC_ROWS:
        tile = _round_up(tile_raw, ACC_ROWS)
        acc_rows = ACC_ROWS
    else:
        # Tiny inputs: keep padding minimal, accumulator matches the tile.
        tile = _round_up(tile_raw, 8)
        acc_rows = tile
    num_blocks = _cdiv(chw_rows, tile)
    chw_rows_pad = num_blocks * tile
    pad_elems = chw_rows_pad * LANES - chw

    def to_slab(a, pad_value):
        # Reshape of a contiguous array is a free bitcast in XLA; only the
        # ragged-tail pad (pad_elems > 0) materializes a copy.
        a2 = a.reshape(n_batch, chw)
        if pad_elems:
            a2 = jnp.pad(a2, ((0, 0), (0, pad_elems)), constant_values=pad_value)
        return a2.reshape(n_batch, chw_rows_pad, LANES)

    # Padded logits contribute exactly 0 loss (see PAD_LOGIT note above).
    x3 = to_slab(output, PAD_LOGIT)
    y3 = to_slab(target, 0)

    weighted = weight_chw is not None
    xy_spec = pl.BlockSpec((1, tile, LANES), lambda j, b: (b, j, 0))
    inputs = [x3, y3]
    in_specs = [xy_spec, xy_spec]
    if weighted:
        assert weight_chw.shape == output.shape[1:]
        w1 = weight_chw.reshape(chw)
        if pad_elems:
            w1 = jnp.pad(w1, (0, pad_elems))  # zero weight on padded elements
        inputs.append(w1.reshape(chw_rows_pad, LANES))
        # Index depends only on the chw-block axis -> block stays resident in
        # VMEM while the inner batch axis sweeps; HBM reads it only once.
        in_specs.append(pl.BlockSpec((tile, LANES), lambda j, b: (j, 0)))

    kernel = _make_bce_kernel(tile, acc_rows, weighted)

    partials = pl.pallas_call(
        kernel,
        out_shape=jax.ShapeDtypeStruct((num_blocks, 1, LANES), jnp.float32),
        grid_spec=pltpu.PrefetchScalarGridSpec(
            num_scalar_prefetch=0,
            grid=(num_blocks, n_batch),
            in_specs=in_specs,
            out_specs=pl.BlockSpec((1, 1, LANES), lambda j, b: (j, 0, 0)),
            scratch_shapes=[pltpu.VMEM((acc_rows, LANES), jnp.float32)],
        ),
        compiler_params=pltpu.CompilerParams(
            # chw-block axis is safely parallel (per-block partial outputs,
            # per-core scratch reset every j-sweep); batch axis is the
            # sequential reduction axis.
            dimension_semantics=("parallel", "arbitrary"),
            vmem_limit_bytes=VMEM_LIMIT_BYTES,
        ),
    )(*inputs)

    # Tiny epilogue: sum num_blocks * 128 partials and normalize (mean).
    return (jnp.sum(partials) / total).astype(jnp.float32)


def _reference(output, target, weight_chw=None):
    x = output.astype(jnp.float32)
    y = target.astype(jnp.float32)
    loss = jnp.maximum(x, 0.0) - x * y + jnp.log1p(jnp.exp(-jnp.abs(x)))
    if weight_chw is not None:
        loss = loss * weight_chw.astype(jnp.float32)[None]
    return jnp.mean(loss)


if __name__ == "__main__":
    key = jax.random.PRNGKey(0)
    k1, k2, k3, k4 = jax.random.split(key, 4)

    N, C, H, W = 2, 4, 16, 16
    logits = jax.random.normal(k1, (N, C, H, W), dtype=jnp.float32)
    targets = (jax.random.uniform(k2, (N, C, H, W)) > 0.5).astype(jnp.float32)

    # Per-channel weight, mirroring the torch module's
    #   torch.tensor(weight).expand(256, 256, -1).transpose(0, 2) -> (C, H, W)
    # (value depends only on the channel).
    weight_list = jnp.array([1.0, 2.0, 0.5, 1.5], dtype=jnp.float32)  # len == C
    weight_chw = jnp.broadcast_to(weight_list[:, None, None], (C, H, W))

    loss_w = jax.block_until_ready(bce_with_logits_loss(logits, targets, weight_chw))
    ref_w = _reference(logits, targets, weight_chw)
    assert jnp.allclose(loss_w, ref_w, rtol=1e-5, atol=1e-6), (loss_w, ref_w)

    # weight=None path (default module construction): 2-input kernel variant.
    loss_nw = jax.block_until_ready(bce_with_logits_loss(logits, targets, None))
    ref_nw = _reference(logits, targets, None)
    assert jnp.allclose(loss_nw, ref_nw, rtol=1e-5, atol=1e-6), (loss_nw, ref_nw)

    # Ragged shape exercising the padded-tail path (C*H*W % 128 != 0); padded
    # logits/targets contribute exactly 0 loss so no mask/correction is needed.
    N2, C2, H2, W2 = 2, 3, 5, 7
    lg2 = jax.random.normal(k3, (N2, C2, H2, W2), dtype=jnp.float32)
    tg2 = (jax.random.uniform(k4, (N2, C2, H2, W2)) > 0.5).astype(jnp.float32)
    wc2 = jnp.broadcast_to(
        jnp.array([0.5, 1.0, 2.0], jnp.float32)[:, None, None], (C2, H2, W2))
    for wc in (None, wc2):
        got = jax.block_until_ready(bce_with_logits_loss(lg2, tg2, wc))
        want = _reference(lg2, tg2, wc)
        assert jnp.allclose(got, want, rtol=1e-5, atol=1e-6), (got, want)

    # bf16 inputs (native-dtype streaming, f32 compute inside the kernel).
    got_bf = jax.block_until_ready(
        bce_with_logits_loss(logits.astype(jnp.bfloat16),
                             targets.astype(jnp.bfloat16), None))
    want_bf = _reference(logits.astype(jnp.bfloat16), targets.astype(jnp.bfloat16))
    assert jnp.allclose(got_bf, want_bf, rtol=1e-3, atol=1e-3), (got_bf, want_bf)

    print("KERNEL_OK")
</pallas_src>

<mosaic_0001>
module attributes {stable_mosaic.version = 11 : i64} {
  func.func @kernel(%arg0: i32, %arg1: i32, %arg2: memref<1x8x128xf32, #tpu.memory_space<vmem>>, %arg3: memref<1x8x128xf32, #tpu.memory_space<vmem>>, %arg4: memref<8x128xf32, #tpu.memory_space<vmem>>, %arg5: memref<1x1x128xf32, #tpu.memory_space<vmem>>, %arg6: memref<8x128xf32, #tpu.memory_space<vmem>>) attributes {dimension_semantics = [#tpu.dimension_semantics<parallel>, #tpu.dimension_semantics<arbitrary>], iteration_bounds = array<i64: 1, 2>, scalar_prefetch = 0 : i64, scratch_operands = 1 : i64, tpu.core_type = #tpu.core_type<tc>, window_params = [{transform_indices = @transform_0, window_bounds = array<i64: 1, 8, 128>}, {transform_indices = @transform_1, window_bounds = array<i64: 1, 8, 128>}, {transform_indices = @transform_2, window_bounds = array<i64: 8, 128>}, {transform_indices = @transform_3, window_bounds = array<i64: 1, 1, 128>}]} {
    %c0_i32 = arith.constant 0 : i32
    %0 = arith.cmpi eq, %arg1, %c0_i32 : i32
    %1 = arith.extui %0 : i1 to i32
    %c0_i32_0 = arith.constant 0 : i32
    %2 = arith.cmpi ne, %1, %c0_i32_0 : i32
    scf.if %2 {
      %cst_15 = arith.constant 0.000000e+00 : f32
      %27 = vector.broadcast %cst_15 : f32 to vector<8x128xf32>
      %c0_16 = arith.constant 0 : index
      %c0_17 = arith.constant 0 : index
      %28 = vector.load %arg6[%c0_16, %c0_17] : memref<8x128xf32, #tpu.memory_space<vmem>>, vector<8x128xf32>
      tpu.vector_store %arg6[%c0_16, %c0_17], %27 {strides = array<i32>} : memref<8x128xf32, #tpu.memory_space<vmem>>, vector<8x128xf32>,
    } else {
    }
    %c0 = arith.constant 0 : index
    %c0_1 = arith.constant 0 : index
    %c0_2 = arith.constant 0 : index
    %3 = vector.load %arg2[%c0, %c0_1, %c0_2] : memref<1x8x128xf32, #tpu.memory_space<vmem>>, vector<1x8x128xf32>
    %4 = vector.shape_cast %3 : vector<1x8x128xf32> to vector<8x128xf32>
    %c0_3 = arith.constant 0 : index
    %c0_4 = arith.constant 0 : index
    %c0_5 = arith.constant 0 : index
    %5 = vector.load %arg3[%c0_3, %c0_4, %c0_5] : memref<1x8x128xf32, #tpu.memory_space<vmem>>, vector<1x8x128xf32>
    %6 = vector.shape_cast %5 : vector<1x8x128xf32> to vector<8x128xf32>
    %cst = arith.constant 0.000000e+00 : f32
    %7 = vector.broadcast %cst : f32 to vector<8x128xf32>
    %8 = arith.maximumf %4, %7 : vector<8x128xf32>
    %9 = arith.mulf %4, %6 : vector<8x128xf32>
    %10 = arith.subf %8, %9 : vector<8x128xf32>
    %11 = math.absf %4 : vector<8x128xf32>
    %cst_6 = arith.constant 0.000000e+00 : f32
    %12 = vector.broadcast %cst_6 : f32 to vector<8x128xf32>
    %13 = arith.subf %12, %11 : vector<8x128xf32>
    %14 = math.exp %13 : vector<8x128xf32>
    %15 = math.log1p %14 : vector<8x128xf32>
    %16 = arith.addf %10, %15 : vector<8x128xf32>
    %c0_7 = arith.constant 0 : index
    %c0_8 = arith.constant 0 : index
    %17 = vector.load %arg4[%c0_7, %c0_8] : memref<8x128xf32, #tpu.memory_space<vmem>>, vector<8x128xf32>
    %18 = arith.mulf %16, %17 : vector<8x128xf32>
    %c0_9 = arith.constant 0 : index
    %c0_10 = arith.constant 0 : index
    %19 = vector.load %arg6[%c0_9, %c0_10] : memref<8x128xf32, #tpu.memory_space<vmem>>, vector<8x128xf32>
    %20 = vector.shape_cast %18 : vector<8x128xf32> to vector<1x8x128xf32>
    %cst_11 = arith.constant dense<0.000000e+00> : vector<8x128xf32>
    %21 = vector.multi_reduction <add>, %20, %cst_11 [0] : vector<1x8x128xf32> to vector<8x128xf32>
    %22 = arith.addf %19, %21 : vector<8x128xf32>
    %c0_12 = arith.constant 0 : index
    %c0_13 = arith.constant 0 : index
    %23 = vector.load %arg6[%c0_12, %c0_13] : memref<8x128xf32, #tpu.memory_space<vmem>>, vector<8x128xf32>
    tpu.vector_store %arg6[%c0_12, %c0_13], %22 {strides = array<i32>} : memref<8x128xf32, #tpu.memory_space<vmem>>, vector<8x128xf32>,
    %c1_i32 = arith.constant 1 : i32
    %24 = arith.cmpi eq, %arg1, %c1_i32 : i32
    %25 = arith.extui %24 : i1 to i32
    %c0_i32_14 = arith.constant 0 : i32
    %26 = arith.cmpi ne, %25, %c0_i32_14 : i32
    scf.if %26 {
      %c0_15 = arith.constant 0 : index
      %c0_16 = arith.constant 0 : index
      %27 = vector.load %arg6[%c0_15, %c0_16] : memref<8x128xf32, #tpu.memory_space<vmem>>, vector<8x128xf32>
      %cst_17 = arith.constant dense<0.000000e+00> : vector<128xf32>
      %28 = vector.multi_reduction <add>, %27, %cst_17 [0] : vector<8x128xf32> to vector<128xf32>
      %29 = vector.shape_cast %28 : vector<128xf32> to vector<1x128xf32>
      %c0_18 = arith.constant 0 : index
      %c0_19 = arith.constant 0 : index
      %c0_20 = arith.constant 0 : index
      %30 = vector.load %arg5[%c0_18, %c0_19, %c0_20] : memref<1x1x128xf32, #tpu.memory_space<vmem>>, vector<1x1x128xf32>
      %31 = vector.shape_cast %30 : vector<1x1x128xf32> to vector<1x128xf32>
      %32 = vector.shape_cast %29 : vector<1x128xf32> to vector<1x1x128xf32>
      tpu.vector_store %arg5[%c0_18, %c0_19, %c0_20], %32 {strides = array<i32>} : memref<1x1x128xf32, #tpu.memory_space<vmem>>, vector<1x1x128xf32>,
    } else {
    }
    return
  }
  func.func @transform_0(%arg0: i32, %arg1: i32) -> (i32, i32, i32) {
    %c0_i32 = arith.constant 0 : i32
    %c0_i32_0 = arith.constant 0 : i32
    return %arg1, %arg0, %c0_i32 : i32, i32, i32
  }
  func.func @transform_1(%arg0: i32, %arg1: i32) -> (i32, i32, i32) {
    %c0_i32 = arith.constant 0 : i32
    %c0_i32_0 = arith.constant 0 : i32
    return %arg1, %arg0, %c0_i32 : i32, i32, i32
  }
  func.func @transform_2(%arg0: i32, %arg1: i32) -> (i32, i32) {
    %c0_i32 = arith.constant 0 : i32
    %c0_i32_0 = arith.constant 0 : i32
    return %arg0, %c0_i32 : i32, i32
  }
  func.func @transform_3(%arg0: i32, %arg1: i32) -> (i32, i32, i32) {
    %c0_i32 = arith.constant 0 : i32
    %c0_i32_0 = arith.constant 0 : i32
    %c0_i32_1 = arith.constant 0 : i32
    return %arg0, %c0_i32, %c0_i32_0 : i32, i32, i32
  }
}

</mosaic_0001>

<llo_original>
// kernel: tpu_custom_call.1
$region0: #{tpu_custom_call.1}
  #allocation0 [shape = 'u32[]', space=smem, size = 0x4, offset = 0x4, fixed_abs, tag = 'smem constant byte address 0x4 - core index']
  #allocation1 [shape = 'u32[144,128]{1,0:T(1,128)}', space=vmem, size = 0x12000, scoped, tag = 'internal scratch']
  #allocation2 [shape = 'f32[8,128]{1,0:T(8,128)}', space=vmem, size = 0x1000, scoped, tag = 'scratch operand']
  %s0 = inlined_call_operand.hbm [shape: f32[2,8,128], index: 0, kind: input, shape index: {}]
  %s1 = inlined_call_operand.hbm [shape: f32[2,8,128], index: 1, kind: input, shape index: {}]
  %s2 = inlined_call_operand.hbm [shape: f32[8,128], index: 2, kind: input, shape index: {}]
  %s3 = inlined_call_operand.hbm [shape: f32[1,1,128], index: 3, kind: output, shape index: {}]
  %s4 = sld [smem:[#allocation0]]
  $region65: #{tpu_custom_call.1} parent=0
    _
  %s6 = ssub.s32 1, %s4
  %s7 = scalar_select 0, %s6, %s4
  $region1: #{tpu_custom_call.1} parent=0
    #allocation3 [shape = 'u8[8192]{0}', space=vmem, size = 0x2000, scoped, tag = 'input window, operand 0']
    #allocation4 [shape = 's32[2]{0}', space=sflag, size = 0x8, scoped, tag = 'scoped memory for tpu_custom_call.1']
    #allocation5 [shape = 's32[2]{0}', space=sflag, size = 0x8, scoped, tag = 'scoped memory for tpu_custom_call.1']
    #allocation6 [shape = 'u8[8192]{0}', space=vmem, size = 0x2000, scoped, tag = 'input window, operand 1']
    #allocation7 [shape = 's32[2]{0}', space=sflag, size = 0x8, scoped, tag = 'scoped memory for tpu_custom_call.1']
    #allocation8 [shape = 'u8[4096]{0}', space=vmem, size = 0x1000, scoped, tag = 'input window, operand 2, single buffered']
    #allocation9 [shape = 'u8[512]{0}', space=vmem, size = 0x400, scoped, tag = 'output window, operand 0, single buffered']
    %8 = vsyncpa [#allocation4], 0
    %s9 = scalar_lea.sflag [#allocation4], 1
    %10 = vsyncpa %s9, 0
    %11 = vsyncpa [#allocation7], 0
    %s12 = scalar_lea.sflag [#allocation7], 1
    %13 = vsyncpa %s12, 0
    %14 = vsyncpa [#allocation5], 0
    loop: start=0, step=1, limit=4
    $region2: #{tpu_custom_call.1} parent=1 // loop_pre_header
      _
    $region3: #{tpu_custom_call.1} parent=1 // loop_header
      %s16 = sphi 0, %s20
      %p17 = scmp.ge.s32.totalorder %s16, 4
      %s23 = sphi 0, %s35
      %s24 = sphi 0, %s31
      %s25 = sphi 0, %s23
      %s26 = sphi 0, %s24
      %s27 = sphi 0, %s25
      %s28 = sphi 0, %s26
      %s40 = sphi 0, %s42
      %s43 = sphi 0, %s40
      %s44 = sphi 0, %s43
      %s60 = sphi 0, %s44
      %s68 = sphi 0, %s70
      %s71 = sphi 0, %s68
      %s72 = sphi 0, %s71
      %s88 = sphi 0, %s72
      %s94 = sphi 0, %s96
      %s97 = sphi 0, %s94
      %s98 = sphi 0, %s97
      %s114 = sphi 0, %s98
      %s120 = sphi 0, %s122
      %s123 = sphi 0, %s120
      %s124 = sphi 0, %s123
      %s140 = sphi 0, %s124
    $region4: #{tpu_custom_call.1} parent=1 // loop_header_branch
      %19 = sbr.rel (%p17) target = $region8
    $region5: #{tpu_custom_call.1} parent=1 // loop_body
      %s21 = ssub.s32 %s16, 1
      %s22 = ssub.s32 %s16, 2
      %s29 = sadd.s32 1, %s24
      %p30 = scmp.ge.s32.totalorder %s29, 2
      %s31 = scalar_select %p30, 0, %s29
      %s32 = sadd.s32 1, %s23
      %s33 = scalar_select %p30, %s32, %s23
      %p34 = scmp.ge.s32.totalorder %s33, 1
      %s35 = scalar_select %p34, 0, %s33
      %s36 = ssub.s32 %s24, %s31
      %s37 = ssub.s32 %s23, %s35
      %s38 = sor.u32 %s36, %s37
      %p39 = scmp.eq.s32.totalorder %s38, 0
      %s41 = sadd.s32 %s40, 1
      %s42 = scalar_select %p39, %s40, %s41
      %p45 = pneg %p39
      %p46 = scmp.eq.s32.totalorder %s16, 1
      %p47 = por %p45, %p46
      %p48 = scmp.ne.s32.totalorder %s40, %s43
      %p49 = scmp.eq.s32.totalorder %s16, 0
      %p50 = por %p48, %p49
      %p51 = scmp.ne.s32.totalorder %s40, %s43
      %p52 = scmp.eq.s32.totalorder %s21, 1
      %p53 = por %p51, %p52
      %p54 = scmp.ne.s32.totalorder %s43, %s44
      %p55 = scmp.eq.s32.totalorder %s21, 0
      %p56 = por %p54, %p55
      %p57 = scmp.ne.s32.totalorder %s43, %s44
      %p58 = scmp.eq.s32.totalorder %s22, 1
      %p59 = por %p57, %p58
      %p61 = scmp.ne.s32.totalorder %s44, %s60
      %p62 = scmp.eq.s32.totalorder %s22, 0
      %p63 = por %p61, %p62
      %s64 = ssub.s32 %s24, %s31
      %s65 = ssub.s32 %s23, %s35
      %s66 = sor.u32 %s64, %s65
      %p67 = scmp.eq.s32.totalorder %s66, 0
      %s69 = sadd.s32 %s68, 1
      %s70 = scalar_select %p67, %s68, %s69
      %p73 = pneg %p67
      %p74 = scmp.eq.s32.totalorder %s16, 1
      %p75 = por %p73, %p74
      %p76 = scmp.ne.s32.totalorder %s68, %s71
      %p77 = scmp.eq.s32.totalorder %s16, 0
      %p78 = por %p76, %p77
      %p79 = scmp.ne.s32.totalorder %s68, %s71
      %p80 = scmp.eq.s32.totalorder %s21, 1
      %p81 = por %p79, %p80
      %p82 = scmp.ne.s32.totalorder %s71, %s72
      %p83 = scmp.eq.s32.totalorder %s21, 0
      %p84 = por %p82, %p83
      %p85 = scmp.ne.s32.totalorder %s71, %s72
      %p86 = scmp.eq.s32.totalorder %s22, 1
      %p87 = por %p85, %p86
      %p89 = scmp.ne.s32.totalorder %s72, %s88
      %p90 = scmp.eq.s32.totalorder %s22, 0
      %p91 = por %p89, %p90
      %s92 = ssub.s32 %s23, %s35
      %p93 = scmp.eq.s32.totalorder %s92, 0
      %s95 = sadd.s32 %s94, 1
      %s96 = scalar_select %p93, %s94, %s95
      %p99 = pneg %p93
      %p100 = scmp.eq.s32.totalorder %s16, 1
      %p101 = por %p99, %p100
      %p102 = scmp.ne.s32.totalorder %s94, %s97
      %p103 = scmp.eq.s32.totalorder %s16, 0
      %p104 = por %p102, %p103
      %p105 = scmp.ne.s32.totalorder %s94, %s97
      %p106 = scmp.eq.s32.totalorder %s21, 1
      %p107 = por %p105, %p106
      %p108 = scmp.ne.s32.totalorder %s97, %s98
      %p109 = scmp.eq.s32.totalorder %s21, 0
      %p110 = por %p108, %p109
      %p111 = scmp.ne.s32.totalorder %s97, %s98
      %p112 = scmp.eq.s32.totalorder %s22, 1
      %p113 = por %p111, %p112
      %p115 = scmp.ne.s32.totalorder %s98, %s114
      %p116 = scmp.eq.s32.totalorder %s22, 0
      %p117 = por %p115, %p116
      %s118 = ssub.s32 %s23, %s35
      %p119 = scmp.eq.s32.totalorder %s118, 0
      %s121 = sadd.s32 %s120, 1
      %s122 = scalar_select %p119, %s120, %s121
      %p125 = pneg %p119
      %p126 = scmp.eq.s32.totalorder %s16, 1
      %p127 = por %p125, %p126
      %p128 = scmp.ne.s32.totalorder %s120, %s123
      %p129 = scmp.eq.s32.totalorder %s16, 0
      %p130 = por %p128, %p129
      %p131 = scmp.ne.s32.totalorder %s120, %s123
      %p132 = scmp.eq.s32.totalorder %s21, 1
      %p133 = por %p131, %p132
      %p134 = scmp.ne.s32.totalorder %s123, %s124
      %p135 = scmp.eq.s32.totalorder %s21, 0
      %p136 = por %p134, %p135
      %p137 = scmp.ne.s32.totalorder %s123, %s124
      %p138 = scmp.eq.s32.totalorder %s22, 1
      %p139 = por %p137, %p138
      %p141 = scmp.ne.s32.totalorder %s124, %s140
      %p142 = scmp.eq.s32.totalorder %s22, 0
      %p143 = por %p141, %p142
      %p144 = scmp.le.s32.totalorder 1, %s16
      %p145 = scmp.lt.s32.totalorder %s16, 3
      %p146 = pnand %p144, %p145
      %p147 = pneg %p146
      // Predicated region
      $region9: #{tpu_custom_call.1} parent=5 // pred_check
        _
      $region10: #{tpu_custom_call.1} parent=5 // pred_check_branch
        %149 = sbr.rel (%p146) target = $region12
      $region11: #{tpu_custom_call.1} parent=5 // pred_region
        %s150 = ssub.s32 %s16, 1
        // Predicated region
        $region13: #{tpu_custom_call.1} parent=11 // pred_check
          %p151 = pneg %p110
        $region14: #{tpu_custom_call.1} parent=11 // pred_check_branch
          %153 = sbr.rel (%p151) target = $region16
        $region15: #{tpu_custom_call.1} parent=11 // pred_region
          %s155 = ssub.s32 128, 128
          %156 = vsyncadd [#allocation7], %s155
          %s157 = smul.addr %s25, 128
          %s158 = scalar_lea.hbm %s2, %s157
          %s160 = sshll.u32 [#allocation8], 4
          %s161 = int_to_ptr.vmem [resolvable:$true] %s160
          %163 = dma.hbm_to_vmem [thread:$0]  %s158, 128, %s161, [#allocation7]
        $region16: #{tpu_custom_call.1} parent=11 // pred_fallthru
          _
      $region12: #{tpu_custom_call.1} parent=5 // pred_fallthru
        _
      %p164 = scmp.lt.s32.totalorder %s16, 2
      // Predicated region
      $region17: #{tpu_custom_call.1} parent=5 // pred_check
        %p165 = pneg %p164
      $region18: #{tpu_custom_call.1} parent=5 // pred_check_branch
        %167 = sbr.rel (%p165) target = $region20
      $region19: #{tpu_custom_call.1} parent=5 // pred_region
        // Predicated region
        $region21: #{tpu_custom_call.1} parent=19 // pred_check
          %p168 = pneg %p50
        $region22: #{tpu_custom_call.1} parent=19 // pred_check_branch
          %170 = sbr.rel (%p168) target = $region24
        $region23: #{tpu_custom_call.1} parent=19 // pred_region
          %s171 = sand.u32 %s40, 1
          %s172 = scalar_lea.sflag [#allocation4], %s171
          %s173 = sand.u32 %s40, 1
          %s174 = smul.addr %s173, 8
          %s175 = scalar_lea.vmem [#allocation3], %s174
          %s177 = ssub.s32 128, 128
          %178 = vsyncadd %s172, %s177
          %s179 = sadd.s32 %s23, %s24
          %s180 = smul.addr %s179, 128
          %s181 = scalar_lea.hbm %s0, %s180
          %s183 = sshll.u32 %s175, 4
          %s184 = int_to_ptr.vmem [resolvable:$true] %s183
          %186 = dma.hbm_to_vmem [thread:$0]  %s181, 128, %s184, %s172
        $region24: #{tpu_custom_call.1} parent=19 // pred_fallthru
          _
        // Predicated region
        $region25: #{tpu_custom_call.1} parent=19 // pred_check
          %p187 = pneg %p78
        $region26: #{tpu_custom_call.1} parent=19 // pred_check_branch
          %189 = sbr.rel (%p187) target = $region28
        $region27: #{tpu_custom_call.1} parent=19 // pred_region
          %s190 = sand.u32 %s16, 1
          %s191 = scalar_lea.sflag [#allocation7], %s190
          %s192 = sand.u32 %s68, 1
          %s193 = smul.addr %s192, 8
          %s194 = scalar_lea.vmem [#allocation6], %s193
          %s196 = ssub.s32 128, 128
          %197 = vsyncadd %s191, %s196
          %s198 = sadd.s32 %s23, %s24
          %s199 = smul.addr %s198, 128
          %s200 = scalar_lea.hbm %s1, %s199
          %s202 = sshll.u32 %s194, 4
          %s203 = int_to_ptr.vmem [resolvable:$true] %s202
          %205 = dma.hbm_to_vmem [thread:$0]  %s200, 128, %s203, %s191
        $region28: #{tpu_custom_call.1} parent=19 // pred_fallthru
          _
      $region20: #{tpu_custom_call.1} parent=5 // pred_fallthru
        _
      %p206 = scmp.le.s32.totalorder 1, %s16
      %p207 = scmp.lt.s32.totalorder %s16, 3
      %p208 = pnand %p206, %p207
      %p209 = pneg %p208
      // Predicated region
      $region29: #{tpu_custom_call.1} parent=5 // pred_check
        _
      $region30: #{tpu_custom_call.1} parent=5 // pred_check_branch
        %211 = sbr.rel (%p208) target = $region32
      $region31: #{tpu_custom_call.1} parent=5 // pred_region
        %s212 = ssub.s32 %s16, 1
        %s213 = sand.u32 %s43, 1
        %s214 = scalar_lea.sflag [#allocation4], %s213
        %s215 = sand.u32 %s43, 1
        %s216 = smul.addr %s215, 8
        %s217 = scalar_lea.vmem [#allocation3], %s216
        // Predicated region
        $region33: #{tpu_custom_call.1} parent=31 // pred_check
          %p218 = pneg %p56
        $region34: #{tpu_custom_call.1} parent=31 // pred_check_branch
          %220 = sbr.rel (%p218) target = $region36
        $region35: #{tpu_custom_call.1} parent=31 // pred_region
          %221 = dma.done %s214, 128
        $region36: #{tpu_custom_call.1} parent=31 // pred_fallthru
          _
        %s222 = sand.u32 %s21, 1
        %s223 = scalar_lea.sflag [#allocation7], %s222
        %s224 = sand.u32 %s71, 1
        %s225 = smul.addr %s224, 8
        %s226 = scalar_lea.vmem [#allocation6], %s225
        // Predicated region
        $region37: #{tpu_custom_call.1} parent=31 // pred_check
          %p227 = pneg %p84
        $region38: #{tpu_custom_call.1} parent=31 // pred_check_branch
          %229 = sbr.rel (%p227) target = $region40
        $region39: #{tpu_custom_call.1} parent=31 // pred_region
          %230 = dma.done %s223, 128
        $region40: #{tpu_custom_call.1} parent=31 // pred_fallthru
          _
        // Predicated region
        $region41: #{tpu_custom_call.1} parent=31 // pred_check
          %p231 = pneg %p110
        $region42: #{tpu_custom_call.1} parent=31 // pred_check_branch
          %233 = sbr.rel (%p231) target = $region44
        $region43: #{tpu_custom_call.1} parent=31 // pred_region
          %234 = dma.done [#allocation7], 128
        $region44: #{tpu_custom_call.1} parent=31 // pred_fallthru
          _
        %s235 = sand.u32 %s43, 1
        %s236 = scalar_lea.sflag [#allocation4], %s235
        %s237 = sand.u32 %s43, 1
        %s238 = smul.addr %s237, 8
        %s239 = scalar_lea.vmem [#allocation3], %s238
        %p240 = pneg %p56
        %p241 = pneg %p53
        %s242 = sand.u32 %s21, 1
        %s243 = scalar_lea.sflag [#allocation7], %s242
        %s244 = sand.u32 %s71, 1
        %s245 = smul.addr %s244, 8
        %s246 = scalar_lea.vmem [#allocation6], %s245
        %p247 = pneg %p84
        %p248 = pneg %p81
        %p249 = pneg %p110
        %p250 = pneg %p107
        %p251 = pneg %p136
        %p252 = pneg %p133
        %p253 = scmp.eq.s32.totalorder %s26, 0
        // Predicated region
        $region45: #{tpu_custom_call.1} parent=31 // pred_check
          %p254 = pneg %p253
        $region46: #{tpu_custom_call.1} parent=31 // pred_check_branch
          %256 = sbr.rel (%p254) target = $region48
        $region47: #{tpu_custom_call.1} parent=31 // pred_region
          %257 = vst [vmem:[#allocation2] sm:$0xff] 0.0
        $region48: #{tpu_custom_call.1} parent=31 // pred_fallthru
          _
        %v258 = vld [vmem:[%s217] sm:$0xff]
        %v259 = vld [vmem:[%s226] sm:$0xff]
        %v260 = vmax.f32 %v258, 0.0
        %v261 = vmul.f32 %v258, %v259
        %v262 = vsub.f32 %v260, %v261
        %v263 = vand.u32 2147483647, %v258
        %v264 = vsub.f32 0.0, %v263
        %v265 = vmul.f32 %v264, 1.442695
        %v266 = vpow.pop %v265
        %v267 = vadd.f32 %v266, 1.0
        %v268 = vlog2.pop %v267
        %v269 = vmul.f32 %v268, 0.6931472
        %v270 = vmul.f32 -0.5, %v266
        %v271 = vadd.f32 %v270, 1.0
        %v272 = vmul.f32 %v271, %v266
        %v273 = vand.u32 2147483647, %v266
        %vm274 = vcmp.lt.f32.partialorder %v273, 0.0004427343
        %v275 = vsel %vm274, %v272, %v269
        %v276 = vadd.f32 %v262, %v275
        %v277 = vld [vmem:[#allocation8] sm:$0xff]
        %v278 = vmul.f32 %v276, %v277
        %v279 = vld [vmem:[#allocation2] sm:$0xff]
        %v280 = vadd.f32 %v278, 0.0
        %v281 = vadd.f32 %v279, %v280
        %282 = vst [vmem:[#allocation2] sm:$0xff] %v281
        %p283 = scmp.eq.s32.totalorder %s26, 1
        // Predicated region
        $region49: #{tpu_custom_call.1} parent=31 // pred_check
          %p284 = pneg %p283
        $region50: #{tpu_custom_call.1} parent=31 // pred_check_branch
          %286 = sbr.rel (%p284) target = $region52
        $region51: #{tpu_custom_call.1} parent=31 // pred_region
          %v287 = vld [vmem:[#allocation2] sm:$0xff]
          %v288 = vrot.slane %v287, 4
          %v289 = vadd.f32 %v287, %v288
          %v290 = vrot.slane %v289, 2
          %v291 = vadd.f32 %v289, %v290
          %v292 = vrot.slane %v291, 1
          %v293 = vadd.f32 %v291, %v292
          %294 = vst [vmem:[#allocation9] sm:$0x1] %v293
        $region52: #{tpu_custom_call.1} parent=31 // pred_fallthru
          _
        // Predicated region
        $region53: #{tpu_custom_call.1} parent=31 // pred_check
          %p295 = pneg %p133
        $region54: #{tpu_custom_call.1} parent=31 // pred_check_branch
          %297 = sbr.rel (%p295) target = $region56
        $region55: #{tpu_custom_call.1} parent=31 // pred_region
          %s299 = ssub.s32 16, 16
          %300 = vsyncadd [#allocation5], %s299
          %s301 = smul.addr %s25, 16
          %s302 = scalar_lea.hbm %s3, %s301
          %s304 = sshll.u32 [#allocation9], 4
          %s305 = int_to_ptr.vmem [resolvable:$true] %s304
          %307 = dma.vmem_to_hbm [thread:$0]  %s305, 16, %s302, [#allocation5]
        $region56: #{tpu_custom_call.1} parent=31 // pred_fallthru
          _
        // Predicated region
        $region57: #{tpu_custom_call.1} parent=31 // pred_check
          %p308 = pneg %p133
        $region58: #{tpu_custom_call.1} parent=31 // pred_check_branch
          %310 = sbr.rel (%p308) target = $region60
        $region59: #{tpu_custom_call.1} parent=31 // pred_region
          %311 = dma.done [#allocation5], 16
        $region60: #{tpu_custom_call.1} parent=31 // pred_fallthru
          _
      $region32: #{tpu_custom_call.1} parent=5 // pred_fallthru
        _
      %p312 = scmp.le.s32.totalorder 2, %s16
      // Predicated region
      $region61: #{tpu_custom_call.1} parent=5 // pred_check
        %p313 = pneg %p312
      $region62: #{tpu_custom_call.1} parent=5 // pred_check_branch
        %315 = sbr.rel (%p313) target = $region64
      $region63: #{tpu_custom_call.1} parent=5 // pred_region
        %s316 = ssub.s32 %s16, 2
      $region64: #{tpu_custom_call.1} parent=5 // pred_fallthru
        _
    $region6: #{tpu_custom_call.1} parent=1 // loop_footer
      %s20 = sadd.s32 1, %s16
    $region7: #{tpu_custom_call.1} parent=1 // loop_footer_branch
      %15 = sbr.rel target = $region3
    $region8: #{tpu_custom_call.1} parent=1 // loop_exit
      _
    %317 = vsyncpa [#allocation4], 1
    %s318 = scalar_lea.sflag [#allocation4], 1
    %319 = vsyncpa %s318, 1
    %320 = vsyncpa [#allocation7], 1
    %s321 = scalar_lea.sflag [#allocation7], 1
    %322 = vsyncpa %s321, 1
    %323 = vsyncpa [#allocation5], 1
    %s324 = scalar_lea.sflag [#allocation5], 1
    %325 = vsyncpa %s324, 1

</llo_original>
